<compile_context>
chip_gen: v7x
topology: tpu7x:2x2x1
jax: 0.10.0
libtpu: 0.0.40
codegen_flags: <defaults>
</compile_context>

<pallas_src>
import jax
import jax.numpy as jnp
from jax import lax
from jax.experimental import pallas as pl
from jax.experimental.pallas import tpu as pltpu


def _round_up(x: int, m: int) -> int:
    return ((x + m - 1) // m) * m


def _linear_kernel_single_k(x_ref, w_ref, o_ref):
    """Whole K fits in one tile: one MXU pass, store directly (no scratch).

    x_ref: (tm, K)   activations
    w_ref: (tn, K)   weights in native PyTorch (dim_emb, feat_size) layout
    o_ref: (tm, tn)  output tile
    """
    o_ref[...] = lax.dot_general(
        x_ref[...],
        w_ref[...],
        dimension_numbers=(((1,), (1,)), ((), ())),  # contract feature axis
        preferred_element_type=jnp.float32,
    ).astype(o_ref.dtype)


def _linear_kernel_acc(x_ref, w_ref, o_ref, acc_ref):
    """K-tiled reduction accumulated in an f32 VMEM scratch.

    x_ref: (tm, tk), w_ref: (tn, tk), o_ref/acc_ref: (tm, tn)
    """
    k = pl.program_id(2)

    @pl.when(k == 0)
    def _():
        acc_ref[...] = jnp.zeros_like(acc_ref)

    acc_ref[...] += lax.dot_general(
        x_ref[...],
        w_ref[...],
        dimension_numbers=(((1,), (1,)), ((), ())),
        preferred_element_type=jnp.float32,
    )

    @pl.when(k == pl.num_programs(2) - 1)
    def _():
        o_ref[...] = acc_ref[...].astype(o_ref.dtype)


def linear_sk_forward(x, w, *, tm=256, tn=256, tk=512):
    """y = x @ w.T  (nn.Linear with bias=False).

    x: (B, feat_size) float32
    w: (dim_emb, feat_size) float32  (PyTorch weight layout, consumed as-is)
    returns: (B, dim_emb) float32
    """
    B, F = x.shape
    E, F2 = w.shape
    assert F == F2, "feature dims must match"

    # Clamp tiles to the (padded) problem while keeping (8, 128) granularity.
    tm = min(tm, _round_up(B, 8))      # sublane dim of x / out blocks
    tn = min(tn, _round_up(E, 128))    # lane dim of out block -> lane-dense
    tk = min(tk, _round_up(F, 128))    # lane dim of x / w blocks

    Bp = _round_up(B, tm)
    Ep = _round_up(E, tn)
    Fp = _round_up(F, tk)

    # Zero-pad so every tile is full; zero rows/cols contribute nothing.
    xp = x if (Bp == B and Fp == F) else jnp.pad(x, ((0, Bp - B), (0, Fp - F)))
    wp = w if (Ep == E and Fp == F) else jnp.pad(w, ((0, Ep - E), (0, Fp - F)))

    kt = Fp // tk  # number of K tiles

    cost = pl.CostEstimate(
        flops=2 * B * E * F,
        transcendentals=0,
        bytes_accessed=4 * (B * F + E * F + B * E),
    )

    # VMEM budget: double-buffered x/w/out tiles (+ f32 accumulator) + headroom.
    tile_bytes = 4 * (2 * tm * tk + 2 * tn * tk + 2 * tm * tn + tm * tn)
    vmem_limit = min(max(2 * tile_bytes, 4 * 1024 * 1024), 64 * 1024 * 1024)

    if kt == 1:
        # Single K tile: no reduction axis, no accumulator scratch.
        out = pl.pallas_call(
            _linear_kernel_single_k,
            out_shape=jax.ShapeDtypeStruct((Bp, Ep), jnp.float32),
            grid=(Bp // tm, Ep // tn),
            in_specs=[
                pl.BlockSpec((tm, tk), lambda i, j: (i, 0)),  # x tile
                pl.BlockSpec((tn, tk), lambda i, j: (j, 0)),  # w tile (E, F) layout
            ],
            out_specs=pl.BlockSpec((tm, tn), lambda i, j: (i, j)),
            compiler_params=pltpu.CompilerParams(
                dimension_semantics=("parallel", "parallel"),
                vmem_limit_bytes=vmem_limit,
            ),
            cost_estimate=cost,
        )(xp, wp)
    else:
        out = pl.pallas_call(
            _linear_kernel_acc,
            out_shape=jax.ShapeDtypeStruct((Bp, Ep), jnp.float32),
            grid=(Bp // tm, Ep // tn, kt),
            in_specs=[
                pl.BlockSpec((tm, tk), lambda i, j, k: (i, k)),  # x tile
                pl.BlockSpec((tn, tk), lambda i, j, k: (j, k)),  # w tile (E, F) layout
            ],
            out_specs=pl.BlockSpec((tm, tn), lambda i, j, k: (i, j)),
            scratch_shapes=[pltpu.VMEM((tm, tn), jnp.float32)],
            compiler_params=pltpu.CompilerParams(
                # B/E axes parallel (megacore sharding), K reduction arbitrary + last.
                dimension_semantics=("parallel", "parallel", "arbitrary"),
                vmem_limit_bytes=vmem_limit,
            ),
            cost_estimate=cost,
        )(xp, wp)

    # Slice away the lane/sublane padding.
    return out[:B, :E]


if __name__ == "__main__":
    # Small shapes consistent with the module: feat_size=32, dim_emb=16, batch=8.
    feat_size = 32
    dim_emb = 16
    batch = 8

    key = jax.random.PRNGKey(0)
    kx, kw = jax.random.split(key)

    x = jax.random.normal(kx, (batch, feat_size), dtype=jnp.float32)
    # Deterministic init of linear_layer weight (dim_emb, feat_size), bias=False.
    w1 = jax.random.normal(kw, (dim_emb, feat_size), dtype=jnp.float32) * 0.1
    # TODO(synk): relu1 / linear_layer2 are defined in __init__ but unused in
    # forward, so they are intentionally not materialized here.

    y = linear_sk_forward(x, w1)
    y = jax.block_until_ready(y)

    # Reference check against plain JAX.
    y_ref = x @ w1.T
    assert y.shape == (batch, dim_emb)
    assert jnp.allclose(y, y_ref, atol=1e-5, rtol=1e-5)

    print("KERNEL_OK")
</pallas_src>

<mosaic_0001>
module attributes {stable_mosaic.version = 11 : i64} {
  func.func @_linear_kernel_single_k(%arg0: i32, %arg1: i32, %arg2: memref<8x128xf32, #tpu.memory_space<vmem>>, %arg3: memref<128x128xf32, #tpu.memory_space<vmem>>, %arg4: memref<8x128xf32, #tpu.memory_space<vmem>>) attributes {dimension_semantics = [#tpu.dimension_semantics<parallel>, #tpu.dimension_semantics<parallel>], iteration_bounds = array<i64: 1, 1>, scalar_prefetch = 0 : i64, scratch_operands = 0 : i64, tpu.core_type = #tpu.core_type<tc>, window_params = [{transform_indices = @transform_0, window_bounds = array<i64: 8, 128>}, {transform_indices = @transform_1, window_bounds = array<i64: 128, 128>}, {transform_indices = @transform_2, window_bounds = array<i64: 8, 128>}]} {
    %c0 = arith.constant 0 : index
    %c0_0 = arith.constant 0 : index
    %0 = vector.load %arg2[%c0, %c0_0] : memref<8x128xf32, #tpu.memory_space<vmem>>, vector<8x128xf32>
    %c0_1 = arith.constant 0 : index
    %c0_2 = arith.constant 0 : index
    %1 = vector.load %arg3[%c0_1, %c0_2] : memref<128x128xf32, #tpu.memory_space<vmem>>, vector<128x128xf32>
    %cst = arith.constant dense<0.000000e+00> : vector<8x128xf32>
    %2 = tpu.matmul %0, %1, %cst {dimension_numbers = #tpu.dot_dimension_numbers<[1], [1], [0], [0], [0, 0, 1, 0], [], []>} : vector<8x128xf32>, vector<128x128xf32>, vector<8x128xf32> -> vector<8x128xf32>
    %c0_3 = arith.constant 0 : index
    %c0_4 = arith.constant 0 : index
    %3 = vector.load %arg4[%c0_3, %c0_4] : memref<8x128xf32, #tpu.memory_space<vmem>>, vector<8x128xf32>
    tpu.vector_store %arg4[%c0_3, %c0_4], %2 {strides = array<i32>} : memref<8x128xf32, #tpu.memory_space<vmem>>, vector<8x128xf32>,
    return
  }
  func.func @transform_0(%arg0: i32, %arg1: i32) -> (i32, i32) {
    %c0_i32 = arith.constant 0 : i32
    %c0_i32_0 = arith.constant 0 : i32
    return %arg0, %c0_i32 : i32, i32
  }
  func.func @transform_1(%arg0: i32, %arg1: i32) -> (i32, i32) {
    %c0_i32 = arith.constant 0 : i32
    %c0_i32_0 = arith.constant 0 : i32
    return %arg1, %c0_i32 : i32, i32
  }
  func.func @transform_2(%arg0: i32, %arg1: i32) -> (i32, i32) {
    %c0_i32 = arith.constant 0 : i32
    return %arg0, %arg1 : i32, i32
  }
}

</mosaic_0001>

<llo_original>
// kernel: tpu_custom_call.1
$region0: #{tpu_custom_call.1}
  #allocation0 [shape = 'u32[]', space=smem, size = 0x4, offset = 0x4, fixed_abs, tag = 'smem constant byte address 0x4 - core index']
  #allocation1 [shape = 'u32[144,128]{1,0:T(1,128)}', space=vmem, size = 0x12000, scoped, tag = 'internal scratch']
  %s0 = inlined_call_operand.hbm [shape: f32[8,128], index: 0, kind: input, shape index: {}]
  %s1 = inlined_call_operand.hbm [shape: f32[128,128], index: 1, kind: input, shape index: {}]
  %s2 = inlined_call_operand.hbm [shape: f32[8,128], index: 2, kind: output, shape index: {}]
  %s3 = sld [smem:[#allocation0]]
  $region26: #{tpu_custom_call.1} parent=0
    _
  %s5 = ssub.s32 1, %s3
  %s6 = scalar_select 0, %s5, %s3
  $region1: #{tpu_custom_call.1} parent=0
    #allocation2 [shape = 'u8[4096]{0}', space=vmem, size = 0x1000, scoped, tag = 'input window, operand 0, single buffered']
    #allocation3 [shape = 's32[1]{0}', space=sflag, size = 0x4, scoped, tag = 'scoped memory for tpu_custom_call.1']
    #allocation4 [shape = 's32[1]{0}', space=sflag, size = 0x4, scoped, tag = 'scoped memory for tpu_custom_call.1']
    #allocation5 [shape = 'u8[65536]{0}', space=vmem, size = 0x10000, scoped, tag = 'input window, operand 1, single buffered']
    #allocation6 [shape = 's32[1]{0}', space=sflag, size = 0x4, scoped, tag = 'scoped memory for tpu_custom_call.1']
    #allocation7 [shape = 'u8[4096]{0}', space=vmem, size = 0x1000, scoped, tag = 'output window, operand 0, single buffered']
    %7 = vsyncpa [#allocation3], 0
    %8 = vsyncpa [#allocation6], 0
    %9 = vsyncpa [#allocation4], 0
    // Predicated region
    $region2: #{tpu_custom_call.1} parent=1 // pred_check
      _
    $region3: #{tpu_custom_call.1} parent=1 // pred_check_branch
      %11 = sbr.rel (0) target = $region5
    $region4: #{tpu_custom_call.1} parent=1 // pred_region
      %s13 = ssub.s32 128, 128
      %14 = vsyncadd [#allocation3], %s13
      %s16 = sshll.u32 [#allocation2], 4
      %s17 = int_to_ptr.vmem [resolvable:$true] %s16
      %19 = dma.hbm_to_vmem [thread:$0]  %s0, 128, %s17, [#allocation3]
    $region5: #{tpu_custom_call.1} parent=1 // pred_fallthru
      _
    // Predicated region
    $region6: #{tpu_custom_call.1} parent=1 // pred_check
      _
    $region7: #{tpu_custom_call.1} parent=1 // pred_check_branch
      %21 = sbr.rel (0) target = $region9
    $region8: #{tpu_custom_call.1} parent=1 // pred_region
      %s23 = ssub.s32 2048, 2048
      %24 = vsyncadd [#allocation6], %s23
      %s25 = sshll.u32 [#allocation5], 4
      %s26 = int_to_ptr.vmem [resolvable:$true] %s25
      %31 = dma.hbm_to_vmem [thread:$0]  %s1, 2048, %s26, [#allocation6], 128, 128, 8
    $region9: #{tpu_custom_call.1} parent=1 // pred_fallthru
      _
    // Predicated region
    $region10: #{tpu_custom_call.1} parent=1 // pred_check
      _
    $region11: #{tpu_custom_call.1} parent=1 // pred_check_branch
      %33 = sbr.rel (0) target = $region13
    $region12: #{tpu_custom_call.1} parent=1 // pred_region
      %34 = dma.done [#allocation3], 128
    $region13: #{tpu_custom_call.1} parent=1 // pred_fallthru
      _
    // Predicated region
    $region14: #{tpu_custom_call.1} parent=1 // pred_check
      _
    $region15: #{tpu_custom_call.1} parent=1 // pred_check_branch
      %36 = sbr.rel (0) target = $region17
    $region16: #{tpu_custom_call.1} parent=1 // pred_region
      %37 = dma.done [#allocation6], 2048
    $region17: #{tpu_custom_call.1} parent=1 // pred_fallthru
      _
    %v38 = vld [vmem:[#allocation2] sm:$0xff]
    %v39 = vld [vmem:[#allocation5] sm:$0xff]
    %v40 = vld [vmem:[#allocation5 + $0x8] sm:$0xff]
    %v41 = vld [vmem:[#allocation5 + $0x10] sm:$0xff]
    %v42 = vld [vmem:[#allocation5 + $0x18] sm:$0xff]
    %v43 = vld [vmem:[#allocation5 + $0x20] sm:$0xff]
    %v44 = vld [vmem:[#allocation5 + $0x28] sm:$0xff]
    %v45 = vld [vmem:[#allocation5 + $0x30] sm:$0xff]
    %v46 = vld [vmem:[#allocation5 + $0x38] sm:$0xff]
    %v47 = vld [vmem:[#allocation5 + $0x40] sm:$0xff]
    %v48 = vld [vmem:[#allocation5 + $0x48] sm:$0xff]
    %v49 = vld [vmem:[#allocation5 + $0x50] sm:$0xff]
    %v50 = vld [vmem:[#allocation5 + $0x58] sm:$0xff]
    %v51 = vld [vmem:[#allocation5 + $0x60] sm:$0xff]
    %v52 = vld [vmem:[#allocation5 + $0x68] sm:$0xff]
    %v53 = vld [vmem:[#allocation5 + $0x70] sm:$0xff]
    %v54 = vld [vmem:[#allocation5 + $0x78] sm:$0xff]
    %55 = vmatprep.subr.mxu0 0.0
    %56 = vmatpush1.xpose.msra.mxu0 %v39
    %57 = vmatprep.subr.mxu0 0.0
    %58 = vmatpush1.xpose.msra.mxu0 %v40
    %59 = vmatprep.subr.mxu0 0.0
    %60 = vmatpush1.xpose.msra.mxu0 %v41
    %61 = vmatprep.subr.mxu0 0.0
    %62 = vmatpush1.xpose.msra.mxu0 %v42
    %63 = vmatprep.subr.mxu0 0.0
    %64 = vmatpush1.xpose.msra.mxu0 %v43
    %65 = vmatprep.subr.mxu0 0.0
    %66 = vmatpush1.xpose.msra.mxu0 %v44
    %67 = vmatprep.subr.mxu0 0.0
    %68 = vmatpush1.xpose.msra.mxu0 %v45
    %69 = vmatprep.subr.mxu0 0.0
    %70 = vmatpush1.xpose.msra.mxu0 %v46
    %71 = vmatprep.subr.mxu0 0.0
    %72 = vmatpush1.xpose.msra.mxu0 %v47
    %73 = vmatprep.subr.mxu0 0.0
    %74 = vmatpush1.xpose.msra.mxu0 %v48
    %75 = vmatprep.subr.mxu0 0.0
    %76 = vmatpush1.xpose.msra.mxu0 %v49
    %77 = vmatprep.subr.mxu0 0.0
    %78 = vmatpush1.xpose.msra.mxu0 %v50
    %79 = vmatprep.subr.mxu0 0.0
    %80 = vmatpush1.xpose.msra.mxu0 %v51
    %81 = vmatprep.subr.mxu0 0.0
    %82 = vmatpush1.xpose.msra.mxu0 %v52
    %83 = vmatprep.subr.mxu0 0.0
    %84 = vmatpush1.xpose.msra.mxu0 %v53
    %85 = vmatprep.subr.mxu0 0.0
    %86 = vmatpush1.xpose.msra.mxu0 %v54
    %87 = vmatprep.subr.mxu0 0.0
    %88 = vmatpush1.xpose.msra.mxu0 0.0
    %89 = vmatprep.subr.mxu0 0.0
    %90 = vmatpush1.xpose.msra.mxu0 0.0
    %91 = vmatprep.subr.mxu0 0.0
    %92 = vmatpush1.xpose.msra.mxu0 0.0
    %93 = vmatprep.subr.mxu0 0.0
    %94 = vmatpush1.xpose.msra.mxu0 0.0
    %95 = vmatprep.subr.mxu0 0.0
    %96 = vmatpush1.xpose.msra.mxu0 0.0
    %97 = vmatprep.subr.mxu0 0.0
    %98 = vmatpush1.xpose.msra.mxu0 0.0
    %99 = vmatprep.subr.mxu0 0.0
    %100 = vmatpush1.xpose.msra.mxu0 0.0
    %101 = vmatprep.subr.mxu0 0.0
    %102 = vmatpush1.xpose.msra.mxu0 0.0
    %103 = vmatprep.subr.mxu0 0.0
    %104 = vmatpush1.xpose.msra.mxu0 0.0
    %105 = vmatprep.subr.mxu0 0.0
    %106 = vmatpush1.xpose.msra.mxu0 0.0
    %107 = vmatprep.subr.mxu0 0.0
    %108 = vmatpush1.xpose.msra.mxu0 0.0
    %109 = vmatprep.subr.mxu0 0.0
    %110 = vmatpush1.xpose.msra.mxu0 0.0
    %111 = vmatprep.subr.mxu0 0.0
    %112 = vmatpush1.xpose.msra.mxu0 0.0
    %113 = vmatprep.subr.mxu0 0.0
    %114 = vmatpush1.xpose.msra.mxu0 0.0
    %115 = vmatprep.subr.mxu0 0.0
    %116 = vmatpush1.xpose.msra.mxu0 0.0
    %117 = vmatprep.subr.mxu0 0.0
    %118 = vmatpush1.xpose.msra.mxu0 0.0
    %119 = vmatprep.mubr.f32.mxu0 0.0
    %120 = vmatmul.mubr.f32.gmra.mrb[0].mxu0 %v38
    %v121 = vpop.f32.mrb[0].mxu0
    %v122 = vadd.f32 0.0, %v121
    %v123 = vpop.f32.mrb[0].mxu0
    %124 = vdwg.mxu0
    %125 = vst [vmem:[#allocation7] sm:$0xff] %v122
    // Predicated region
    $region18: #{tpu_custom_call.1} parent=1 // pred_check
      _
    $region19: #{tpu_custom_call.1} parent=1 // pred_check_branch
      %127 = sbr.rel (0) target = $region21
    $region20: #{tpu_custom_call.1} parent=1 // pred_region
      %s129 = ssub.s32 128, 128
      %130 = vsyncadd [#allocation4], %s129
      %s132 = sshll.u32 [#allocation7], 4
      %s133 = int_to_ptr.vmem [resolvable:$true] %s132
      %135 = dma.vmem_to_hbm [thread:$0]  %s133, 128, %s2, [#allocation4]
    $region21: #{tpu_custom_call.1} parent=1 // pred_fallthru
      _
    // Predicated region
    $region22: #{tpu_custom_call.1} parent=1 // pred_check
      _
    $region23: #{tpu_custom_call.1} parent=1 // pred_check_branch
      %137 = sbr.rel (0) target = $region25
    $region24: #{tpu_custom_call.1} parent=1 // pred_region
      %138 = dma.done [#allocation4], 128
    $region25: #{tpu_custom_call.1} parent=1 // pred_fallthru
      _
    %139 = vsyncpa [#allocation3], 1
    %140 = vsyncpa [#allocation6], 1
    %141 = vsyncpa [#allocation4], 1

</llo_original>
